<compile_context>
chip_gen: v7x
topology: tpu7x:2x2x1
jax: 0.10.0
libtpu: 0.0.40
codegen_flags: <defaults>
</compile_context>

<pallas_src>
import functools

import jax
import jax.numpy as jnp
from jax import lax
from jax.experimental import pallas as pl
from jax.experimental.pallas import tpu as pltpu


LANE = 128


def _round_up(n, m):
    return ((n + m - 1) // m) * m


def _pick_tile(np_, candidates):
    for c in candidates:
        if c <= np_ and np_ % c == 0:
            return c
    return np_


# ---------------- kernel 1: xw = Dinv @ (x @ W)   (row-tiled, computed once) --------
def xw_kernel(x_ref, w_ref, dinv_ref, xw_ref):
    xw = jnp.dot(x_ref[...], w_ref[...], preferred_element_type=jnp.float32)
    # dinv_ref is (tile, 1) -> broadcasts; emit bf16 so stage 2 streams half the bytes
    # and can feed the MXU's bf16 path directly.
    xw_ref[...] = (dinv_ref[...] * xw).astype(jnp.bfloat16)


# ---------------- kernel 2: out = Dinv @ (A @ xw) + b   (tiled accumulator) ---------
def agg_kernel(a_ref, xw_ref, dinv_ref, b_ref, o_ref, *, tile_k):
    k = pl.program_id(1)

    @pl.when(k == 0)
    def _():
        o_ref[...] = jnp.zeros_like(o_ref)

    # A tile is stored int8 in HBM (edge counts are exact); upcast in-vreg to bf16,
    # which hides under the memory bound, and run a bf16 x bf16 MXU matmul with
    # f32 accumulation directly into the resident f32 output block.
    a = a_ref[...].astype(jnp.bfloat16)
    xw_blk = xw_ref[pl.ds(pl.multiple_of(k * tile_k, tile_k), tile_k), :]
    o_ref[...] += jnp.dot(a, xw_blk, preferred_element_type=jnp.float32)

    @pl.when(k == pl.num_programs(1) - 1)
    def _():
        o_ref[...] = dinv_ref[...] * o_ref[...] + b_ref[...]


def gcn_body_forward(x, edge_index, weight, bias):
    """Forward of GCN_Body: one GCNConv(nfeat, nhid) layer.

    x:          [N, nfeat] float32
    edge_index: [2, E] int32  (row 0 = source, row 1 = target)
    weight:     [nfeat, nhid] float32
    bias:       [nhid] float32
    returns:    [N, nhid] float32
    """
    N, nfeat = x.shape
    nhid = weight.shape[1]

    # ---- padding / tiling -----------------------------------------------------------
    # Lane-dense hidden dim (multiple of 128) and N padded to a multiple of 128 so the
    # asymmetric tiles below always divide it evenly.
    Np = _round_up(N, LANE)
    Hp = _round_up(max(nhid, LANE), LANE)
    # Keep the row (parallel) extent >= 2 when possible for v7x's two TensorCores by
    # growing the reduction tile, not the row tile.
    tile_m = _pick_tile(Np, [512, 256, 128])
    tile_k = _pick_tile(Np, [2048, 1024, 512, 256, 128])

    # ---- glue (plain JAX), all O(E) except the single int8 dense-A materialization ---
    # .add matches GCNConv's scatter-add semantics on duplicate edges.
    # NOTE: int8 represents edge multiplicities exactly only up to 127.
    src, dst = edge_index[0], edge_index[1]
    diag = jnp.arange(N, dtype=jnp.int32)
    A_p = (jnp.zeros((Np, Np), jnp.int8)
           .at[dst, src].add(jnp.int8(1))       # adjacency (scatter-add, O(E))
           .at[diag, diag].add(jnp.int8(1)))    # self loops, no N^2 eye-add
    deg = jnp.zeros((N,), jnp.float32).at[dst].add(1.0) + 1.0   # O(E), +1 self loop
    dinv = lax.rsqrt(deg)                                       # D^-1/2 (deg >= 1)

    x_p = jnp.zeros((Np, nfeat), jnp.float32).at[:N, :].set(x.astype(jnp.float32))
    dinv_p = jnp.zeros((Np, 1), jnp.float32).at[:N, 0].set(dinv)
    w_p = jnp.zeros((nfeat, Hp), jnp.float32).at[:, :nhid].set(weight.astype(jnp.float32))
    b_p = jnp.zeros((1, Hp), jnp.float32).at[0, :nhid].set(bias.astype(jnp.float32))

    # ---- stage 1: xw = Dinv (x @ W), computed once, emitted bf16 ---------------------
    # TODO(synk): for very large nfeat (>~2-4K) add a K-tiled accumulator here so the
    # per-step x block stays within v7x's 64 MiB VMEM; not needed at these sizes.
    xw = pl.pallas_call(
        xw_kernel,
        out_shape=jax.ShapeDtypeStruct((Np, Hp), jnp.bfloat16),
        grid_spec=pltpu.PrefetchScalarGridSpec(
            num_scalar_prefetch=0,
            grid=(Np // tile_m,),
            in_specs=[
                pl.BlockSpec((tile_m, nfeat), lambda i: (i, 0)),   # x rows
                pl.BlockSpec((nfeat, Hp), lambda i: (0, 0)),       # W (small, resident)
                pl.BlockSpec((tile_m, 1), lambda i: (i, 0)),       # dinv rows
            ],
            out_specs=pl.BlockSpec((tile_m, Hp), lambda i: (i, 0)),
        ),
        compiler_params=pltpu.CompilerParams(
            dimension_semantics=("parallel",)),
    )(x_p, w_p, dinv_p)

    # ---- stage 2: out = Dinv (A @ xw) + b, row/col tiled accumulator pipeline --------
    # A (int8) is the only per-step stream; xw (bf16) is resident for the whole call.
    out_p = pl.pallas_call(
        functools.partial(agg_kernel, tile_k=tile_k),
        out_shape=jax.ShapeDtypeStruct((Np, Hp), jnp.float32),
        grid_spec=pltpu.PrefetchScalarGridSpec(
            num_scalar_prefetch=0,
            grid=(Np // tile_m, Np // tile_k),                     # (rows, reduction)
            in_specs=[
                pl.BlockSpec((tile_m, tile_k), lambda i, k: (i, k)),  # A tile (int8)
                pl.BlockSpec((Np, Hp), lambda i, k: (0, 0)),          # xw, resident
                pl.BlockSpec((tile_m, 1), lambda i, k: (i, 0)),       # dinv rows
                pl.BlockSpec((1, Hp), lambda i, k: (0, 0)),           # bias
            ],
            out_specs=pl.BlockSpec((tile_m, Hp), lambda i, k: (i, 0)),
        ),
        compiler_params=pltpu.CompilerParams(
            dimension_semantics=("parallel", "arbitrary"),
            vmem_limit_bytes=48 * 1024 * 1024),                    # safe on v5e/v6e/v7x
    )(A_p, xw, dinv_p, b_p)

    return out_p[:N, :nhid]


def reference_forward(x, edge_index, weight, bias):
    # Pure-JAX f32 reference (same math, no Pallas) for a sanity check.
    N = x.shape[0]
    src, dst = edge_index[0], edge_index[1]
    A = jnp.zeros((N, N), jnp.float32).at[dst, src].add(1.0)
    A = A + jnp.eye(N, dtype=jnp.float32)
    deg = A.sum(axis=1)
    dinv = jnp.where(deg > 0, lax.rsqrt(deg), 0.0)
    A_hat = dinv[:, None] * A * dinv[None, :]
    return A_hat @ (x @ weight) + bias[None, :]


if __name__ == "__main__":
    # Small, deterministic problem consistent with GCN_Body(nfeat, nhid, dropout)
    N, nfeat, nhid = 64, 32, 16
    key = jax.random.PRNGKey(0)
    kx, ke, kw = jax.random.split(key, 3)

    x = jax.random.normal(kx, (N, nfeat), dtype=jnp.float32)

    # random undirected edges (made symmetric)
    E = 128
    src = jax.random.randint(ke, (E,), 0, N, dtype=jnp.int32)
    dst = jax.random.randint(jax.random.fold_in(ke, 1), (E,), 0, N, dtype=jnp.int32)
    edge_index = jnp.stack([jnp.concatenate([src, dst]),
                            jnp.concatenate([dst, src])], axis=0)

    # deterministic GCNConv parameter init (glorot-uniform weight, zero bias)
    limit = (6.0 / (nfeat + nhid)) ** 0.5
    weight = jax.random.uniform(kw, (nfeat, nhid), jnp.float32, -limit, limit)
    bias = jnp.zeros((nhid,), dtype=jnp.float32)

    out = gcn_body_forward(x, edge_index, weight, bias)
    out = jax.block_until_ready(out)

    ref = reference_forward(x, edge_index, weight, bias)
    assert out.shape == (N, nhid)
    # xw travels through bf16 for the MXU path -> compare at ~bf16 precision.
    assert jnp.allclose(out, ref, atol=2e-2, rtol=2e-2), float(jnp.abs(out - ref).max())

    print("KERNEL_OK")
</pallas_src>

<mosaic_0001>
module attributes {stable_mosaic.version = 11 : i64} {
  func.func @xw_kernel(%arg0: i32, %arg1: memref<128x32xf32, #tpu.memory_space<vmem>>, %arg2: memref<32x128xf32, #tpu.memory_space<vmem>>, %arg3: memref<128x1xf32, #tpu.memory_space<vmem>>, %arg4: memref<128x128xbf16, #tpu.memory_space<vmem>>) attributes {dimension_semantics = [#tpu.dimension_semantics<parallel>], iteration_bounds = array<i64: 1>, scalar_prefetch = 0 : i64, scratch_operands = 0 : i64, tpu.core_type = #tpu.core_type<tc>, window_params = [{transform_indices = @transform_0, window_bounds = array<i64: 128, 32>}, {pipeline_mode = #tpu.pipeline_mode<synchronous>, transform_indices = @transform_1, window_bounds = array<i64: 32, 128>}, {transform_indices = @transform_2, window_bounds = array<i64: 128, 1>}, {transform_indices = @transform_3, window_bounds = array<i64: 128, 128>}]} {
    %c0 = arith.constant 0 : index
    %c0_0 = arith.constant 0 : index
    %0 = vector.load %arg1[%c0, %c0_0] : memref<128x32xf32, #tpu.memory_space<vmem>>, vector<128x32xf32>
    %c0_1 = arith.constant 0 : index
    %c0_2 = arith.constant 0 : index
    %1 = vector.load %arg2[%c0_1, %c0_2] : memref<32x128xf32, #tpu.memory_space<vmem>>, vector<32x128xf32>
    %cst = arith.constant dense<0.000000e+00> : vector<128x128xf32>
    %2 = tpu.matmul %0, %1, %cst {dimension_numbers = #tpu.dot_dimension_numbers<[1], [0], [0], [1], [0, 0, 1, 1], [], []>} : vector<128x32xf32>, vector<32x128xf32>, vector<128x128xf32> -> vector<128x128xf32>
    %c0_3 = arith.constant 0 : index
    %c0_4 = arith.constant 0 : index
    %3 = vector.load %arg3[%c0_3, %c0_4] : memref<128x1xf32, #tpu.memory_space<vmem>>, vector<128x1xf32>
    %4 = vector.broadcast %3 : vector<128x1xf32> to vector<128x128xf32>
    %5 = arith.mulf %4, %2 : vector<128x128xf32>
    %6 = arith.truncf %5 : vector<128x128xf32> to vector<128x128xbf16>
    %c0_5 = arith.constant 0 : index
    %c0_6 = arith.constant 0 : index
    %7 = vector.load %arg4[%c0_5, %c0_6] : memref<128x128xbf16, #tpu.memory_space<vmem>>, vector<128x128xbf16>
    tpu.vector_store %arg4[%c0_5, %c0_6], %6 {strides = array<i32>} : memref<128x128xbf16, #tpu.memory_space<vmem>>, vector<128x128xbf16>,
    return
  }
  func.func @transform_0(%arg0: i32) -> (i32, i32) {
    %c0_i32 = arith.constant 0 : i32
    %c0_i32_0 = arith.constant 0 : i32
    return %arg0, %c0_i32 : i32, i32
  }
  func.func @transform_1(%arg0: i32) -> (i32, i32) {
    %c0_i32 = arith.constant 0 : i32
    %c0_i32_0 = arith.constant 0 : i32
    %c0_i32_1 = arith.constant 0 : i32
    return %c0_i32, %c0_i32_0 : i32, i32
  }
  func.func @transform_2(%arg0: i32) -> (i32, i32) {
    %c0_i32 = arith.constant 0 : i32
    %c0_i32_0 = arith.constant 0 : i32
    return %arg0, %c0_i32 : i32, i32
  }
  func.func @transform_3(%arg0: i32) -> (i32, i32) {
    %c0_i32 = arith.constant 0 : i32
    %c0_i32_0 = arith.constant 0 : i32
    return %arg0, %c0_i32 : i32, i32
  }
}

</mosaic_0001>

<llo_original>
// kernel: tpu_custom_call.1
$region0: #{tpu_custom_call.1}
  #allocation0 [shape = 'u32[]', space=smem, size = 0x4, offset = 0x4, fixed_abs, tag = 'smem constant byte address 0x4 - core index']
  #allocation1 [shape = 'u32[144,128]{1,0:T(1,128)}', space=vmem, size = 0x12000, scoped, tag = 'internal scratch']
  %s0 = inlined_call_operand.vmem [shape: f32[128,32], index: 0, kind: input, shape index: {}]
  %s1 = inlined_call_operand.vmem [shape: f32[32,128], index: 1, kind: input, shape index: {}]
  %s2 = inlined_call_operand.vmem [shape: f32[128,1], index: 2, kind: input, shape index: {}]
  %s3 = inlined_call_operand.hbm [shape: bf16[128,128], index: 3, kind: output, shape index: {}]
  %s4 = sld [smem:[#allocation0]]
  $region22: #{tpu_custom_call.1} parent=0
    _
  %s6 = ssub.s32 1, %s4
  %s7 = scalar_select 0, %s6, %s4
  $region1: #{tpu_custom_call.1} parent=0
    #allocation2 [shape = 'u8[32768]{0}', space=vmem, size = 0x8000, scoped, tag = 'output window, operand 0, single buffered']
    #allocation3 [shape = 's32[1]{0}', space=sflag, size = 0x4, scoped, tag = 'scoped memory for tpu_custom_call.1']
    %8 = vsyncpa [#allocation3], 0
    // Predicated region
    $region2: #{tpu_custom_call.1} parent=1 // pred_check
      _
    $region3: #{tpu_custom_call.1} parent=1 // pred_check_branch
      %10 = sbr.rel (0) target = $region5
    $region4: #{tpu_custom_call.1} parent=1 // pred_region
      _
    $region5: #{tpu_custom_call.1} parent=1 // pred_fallthru
      _
    // Predicated region
    $region6: #{tpu_custom_call.1} parent=1 // pred_check
      _
    $region7: #{tpu_custom_call.1} parent=1 // pred_check_branch
      %12 = sbr.rel (0) target = $region9
    $region8: #{tpu_custom_call.1} parent=1 // pred_region
      _
    $region9: #{tpu_custom_call.1} parent=1 // pred_fallthru
      _
    // Predicated region
    $region10: #{tpu_custom_call.1} parent=1 // pred_check
      _
    $region11: #{tpu_custom_call.1} parent=1 // pred_check_branch
      %14 = sbr.rel (0) target = $region13
    $region12: #{tpu_custom_call.1} parent=1 // pred_region
      _
    $region13: #{tpu_custom_call.1} parent=1 // pred_fallthru
      _
    %v15 = vld [vmem:[%s0] sm:$0xff]
    %v16 = vld [vmem:[%s0 + $0x8] sm:$0xff]
    %v17 = vld [vmem:[%s0 + $0x10] sm:$0xff]
    %v18 = vld [vmem:[%s0 + $0x18] sm:$0xff]
    %v19 = vld [vmem:[%s0 + $0x20] sm:$0xff]
    %v20 = vld [vmem:[%s0 + $0x28] sm:$0xff]
    %v21 = vld [vmem:[%s0 + $0x30] sm:$0xff]
    %v22 = vld [vmem:[%s0 + $0x38] sm:$0xff]
    %v23 = vld [vmem:[%s0 + $0x40] sm:$0xff]
    %v24 = vld [vmem:[%s0 + $0x48] sm:$0xff]
    %v25 = vld [vmem:[%s0 + $0x50] sm:$0xff]
    %v26 = vld [vmem:[%s0 + $0x58] sm:$0xff]
    %v27 = vld [vmem:[%s0 + $0x60] sm:$0xff]
    %v28 = vld [vmem:[%s0 + $0x68] sm:$0xff]
    %v29 = vld [vmem:[%s0 + $0x70] sm:$0xff]
    %v30 = vld [vmem:[%s0 + $0x78] sm:$0xff]
    %v31 = vld [vmem:[%s1] sm:$0xff]
    %v32 = vld [vmem:[%s1 + $0x8] sm:$0xff]
    %v33 = vld [vmem:[%s1 + $0x10] sm:$0xff]
    %v34 = vld [vmem:[%s1 + $0x18] sm:$0xff]
    %vm35 = vcmask 261120
    %v37 = vsel %vm35, %v15, 0
    %v40 = vsel %vm35, %v16, 0
    %v43 = vsel %vm35, %v17, 0
    %v46 = vsel %vm35, %v18, 0
    %v49 = vsel %vm35, %v19, 0
    %v52 = vsel %vm35, %v20, 0
    %v55 = vsel %vm35, %v21, 0
    %v58 = vsel %vm35, %v22, 0
    %v61 = vsel %vm35, %v23, 0
    %v64 = vsel %vm35, %v24, 0
    %v67 = vsel %vm35, %v25, 0
    %v70 = vsel %vm35, %v26, 0
    %v73 = vsel %vm35, %v27, 0
    %v76 = vsel %vm35, %v28, 0
    %v79 = vsel %vm35, %v29, 0
    %v82 = vsel %vm35, %v30, 0
    %84 = vmatprep.subr.mxu0 0.0
    %85 = vmatpush1.msra.mxu0 %v31
    %86 = vmatprep.subr.mxu0 0.0
    %87 = vmatpush1.msra.mxu0 %v32
    %88 = vmatprep.subr.mxu0 0.0
    %89 = vmatpush1.msra.mxu0 %v33
    %90 = vmatprep.subr.mxu0 0.0
    %91 = vmatpush1.msra.mxu0 %v34
    %92 = vmatprep.subr.mxu0 0.0
    %93 = vmatpush1.msra.mxu0 0.0
    %94 = vmatprep.subr.mxu0 0.0
    %95 = vmatpush1.msra.mxu0 0.0
    %96 = vmatprep.subr.mxu0 0.0
    %97 = vmatpush1.msra.mxu0 0.0
    %98 = vmatprep.subr.mxu0 0.0
    %99 = vmatpush1.msra.mxu0 0.0
    %100 = vmatprep.subr.mxu0 0.0
    %101 = vmatpush1.msra.mxu0 0.0
    %102 = vmatprep.subr.mxu0 0.0
    %103 = vmatpush1.msra.mxu0 0.0
    %104 = vmatprep.subr.mxu0 0.0
    %105 = vmatpush1.msra.mxu0 0.0
    %106 = vmatprep.subr.mxu0 0.0
    %107 = vmatpush1.msra.mxu0 0.0
    %108 = vmatprep.subr.mxu0 0.0
    %109 = vmatpush1.msra.mxu0 0.0
    %110 = vmatprep.subr.mxu0 0.0
    %111 = vmatpush1.msra.mxu0 0.0
    %112 = vmatprep.subr.mxu0 0.0
    %113 = vmatpush1.msra.mxu0 0.0
    %114 = vmatprep.subr.mxu0 0.0
    %115 = vmatpush1.msra.mxu0 0.0
    %116 = vmatprep.subr.mxu0 0.0
    %117 = vmatpush1.msra.mxu0 0.0
    %118 = vmatprep.subr.mxu0 0.0
    %119 = vmatpush1.msra.mxu0 0.0
    %120 = vmatprep.subr.mxu0 0.0
    %121 = vmatpush1.msra.mxu0 0.0
    %122 = vmatprep.subr.mxu0 0.0
    %123 = vmatpush1.msra.mxu0 0.0
    %124 = vmatprep.subr.mxu0 0.0
    %125 = vmatpush1.msra.mxu0 0.0
    %126 = vmatprep.subr.mxu0 0.0
    %127 = vmatpush1.msra.mxu0 0.0
    %128 = vmatprep.subr.mxu0 0.0
    %129 = vmatpush1.msra.mxu0 0.0
    %130 = vmatprep.subr.mxu0 0.0
    %131 = vmatpush1.msra.mxu0 0.0
    %132 = vmatprep.subr.mxu0 0.0
    %133 = vmatpush1.msra.mxu0 0.0
    %134 = vmatprep.subr.mxu0 0.0
    %135 = vmatpush1.msra.mxu0 0.0
    %136 = vmatprep.subr.mxu0 0.0
    %137 = vmatpush1.msra.mxu0 0.0
    %138 = vmatprep.subr.mxu0 0.0
    %139 = vmatpush1.msra.mxu0 0.0
    %140 = vmatprep.subr.mxu0 0.0
    %141 = vmatpush1.msra.mxu0 0.0
    %142 = vmatprep.subr.mxu0 0.0
    %143 = vmatpush1.msra.mxu0 0.0
    %144 = vmatprep.subr.mxu0 0.0
    %145 = vmatpush1.msra.mxu0 0.0
    %146 = vmatprep.subr.mxu0 0.0
    %147 = vmatpush1.msra.mxu0 0.0
    %148 = vmatprep.mubr.f32.mxu0 0.0
    %149 = vmatmul.mubr.f32.gmra.mrb[0].mxu0 %v37
    %v150 = vpop.f32.mrb[0].mxu0
    %v151 = vadd.f32 0.0, %v150
    %v152 = vpop.f32.mrb[0].mxu0
    %153 = vmatprep.mubr.f32.mxu0 0.0
    %154 = vmatmul.mubr.f32.gmra.mrb[0].mxu0 %v40
    %v155 = vpop.f32.mrb[0].mxu0
    %v156 = vadd.f32 0.0, %v155
    %v157 = vpop.f32.mrb[0].mxu0
    %158 = vmatprep.mubr.f32.mxu0 0.0
    %159 = vmatmul.mubr.f32.gmra.mrb[0].mxu0 %v43
    %v160 = vpop.f32.mrb[0].mxu0
    %v161 = vadd.f32 0.0, %v160
    %v162 = vpop.f32.mrb[0].mxu0
    %163 = vmatprep.mubr.f32.mxu0 0.0
    %164 = vmatmul.mubr.f32.gmra.mrb[0].mxu0 %v46
    %v165 = vpop.f32.mrb[0].mxu0
    %v166 = vadd.f32 0.0, %v165
    %v167 = vpop.f32.mrb[0].mxu0
    %168 = vmatprep.mubr.f32.mxu0 0.0
    %169 = vmatmul.mubr.f32.gmra.mrb[0].mxu0 %v49
    %v170 = vpop.f32.mrb[0].mxu0
    %v171 = vadd.f32 0.0, %v170
    %v172 = vpop.f32.mrb[0].mxu0
    %173 = vmatprep.mubr.f32.mxu0 0.0
    %174 = vmatmul.mubr.f32.gmra.mrb[0].mxu0 %v52
    %v175 = vpop.f32.mrb[0].mxu0
    %v176 = vadd.f32 0.0, %v175
    %v177 = vpop.f32.mrb[0].mxu0
    %178 = vmatprep.mubr.f32.mxu0 0.0
    %179 = vmatmul.mubr.f32.gmra.mrb[0].mxu0 %v55
    %v180 = vpop.f32.mrb[0].mxu0
    %v181 = vadd.f32 0.0, %v180
    %v182 = vpop.f32.mrb[0].mxu0
    %183 = vmatprep.mubr.f32.mxu0 0.0
    %184 = vmatmul.mubr.f32.gmra.mrb[0].mxu0 %v58
    %v185 = vpop.f32.mrb[0].mxu0
    %v186 = vadd.f32 0.0, %v185
    %v187 = vpop.f32.mrb[0].mxu0
    %188 = vmatprep.mubr.f32.mxu0 0.0
    %189 = vmatmul.mubr.f32.gmra.mrb[0].mxu0 %v61
    %v190 = vpop.f32.mrb[0].mxu0
    %v191 = vadd.f32 0.0, %v190
    %v192 = vpop.f32.mrb[0].mxu0
    %193 = vmatprep.mubr.f32.mxu0 0.0
    %194 = vmatmul.mubr.f32.gmra.mrb[0].mxu0 %v64
    %v195 = vpop.f32.mrb[0].mxu0
    %v196 = vadd.f32 0.0, %v195
    %v197 = vpop.f32.mrb[0].mxu0
    %198 = vmatprep.mubr.f32.mxu0 0.0
    %199 = vmatmul.mubr.f32.gmra.mrb[0].mxu0 %v67
    %v200 = vpop.f32.mrb[0].mxu0
    %v201 = vadd.f32 0.0, %v200
    %v202 = vpop.f32.mrb[0].mxu0
    %203 = vmatprep.mubr.f32.mxu0 0.0
    %204 = vmatmul.mubr.f32.gmra.mrb[0].mxu0 %v70
    %v205 = vpop.f32.mrb[0].mxu0
    %v206 = vadd.f32 0.0, %v205
    %v207 = vpop.f32.mrb[0].mxu0
    %208 = vmatprep.mubr.f32.mxu0 0.0
    %209 = vmatmul.mubr.f32.gmra.mrb[0].mxu0 %v73
    %v210 = vpop.f32.mrb[0].mxu0
    %v211 = vadd.f32 0.0, %v210
    %v212 = vpop.f32.mrb[0].mxu0
    %213 = vmatprep.mubr.f32.mxu0 0.0
    %214 = vmatmul.mubr.f32.gmra.mrb[0].mxu0 %v76
    %v215 = vpop.f32.mrb[0].mxu0
    %v216 = vadd.f32 0.0, %v215
    %v217 = vpop.f32.mrb[0].mxu0
    %218 = vmatprep.mubr.f32.mxu0 0.0
    %219 = vmatmul.mubr.f32.gmra.mrb[0].mxu0 %v79
    %v220 = vpop.f32.mrb[0].mxu0
    %v221 = vadd.f32 0.0, %v220
    %v222 = vpop.f32.mrb[0].mxu0
    %223 = vmatprep.mubr.f32.mxu0 0.0
    %224 = vmatmul.mubr.f32.gmra.mrb[0].mxu0 %v82
    %v225 = vpop.f32.mrb[0].mxu0
    %v226 = vadd.f32 0.0, %v225
    %v227 = vpop.f32.mrb[0].mxu0
    %228 = vdwg.mxu0
    %v229 = vld [vmem:[%s2] sm:$0xff]
    %v230 = vld [vmem:[%s2 + $0x8] sm:$0xff]
    %v231 = vld [vmem:[%s2 + $0x10] sm:$0xff]
    %v232 = vld [vmem:[%s2 + $0x18] sm:$0xff]
    %v233 = vld [vmem:[%s2 + $0x20] sm:$0xff]
    %v234 = vld [vmem:[%s2 + $0x28] sm:$0xff]
    %v235 = vld [vmem:[%s2 + $0x30] sm:$0xff]
    %v236 = vld [vmem:[%s2 + $0x38] sm:$0xff]
    %v237 = vld [vmem:[%s2 + $0x40] sm:$0xff]
    %v238 = vld [vmem:[%s2 + $0x48] sm:$0xff]
    %v239 = vld [vmem:[%s2 + $0x50] sm:$0xff]
    %v240 = vld [vmem:[%s2 + $0x58] sm:$0xff]
    %v241 = vld [vmem:[%s2 + $0x60] sm:$0xff]
    %v242 = vld [vmem:[%s2 + $0x68] sm:$0xff]
    %v243 = vld [vmem:[%s2 + $0x70] sm:$0xff]
    %v244 = vld [vmem:[%s2 + $0x78] sm:$0xff]
    %246 = vset.pattern.permute.xlu0 0
    %247 = vperm.xlu0 %246, %v229
    %v248 = vpop.permute.xlu0 %247
    %251 = vset.pattern.permute.xlu0 0
    %252 = vperm.xlu0 %251, %v230
    %v253 = vpop.permute.xlu0 %252
    %256 = vset.pattern.permute.xlu0 0
    %257 = vperm.xlu0 %256, %v231
    %v258 = vpop.permute.xlu0 %257
    %261 = vset.pattern.permute.xlu0 0
    %262 = vperm.xlu0 %261, %v232
    %v263 = vpop.permute.xlu0 %262
    %266 = vset.pattern.permute.xlu0 0
    %267 = vperm.xlu0 %266, %v233
    %v268 = vpop.permute.xlu0 %267
    %271 = vset.pattern.permute.xlu0 0
    %272 = vperm.xlu0 %271, %v234
    %v273 = vpop.permute.xlu0 %272
    %276 = vset.pattern.permute.xlu0 0
    %277 = vperm.xlu0 %276, %v235
    %v278 = vpop.permute.xlu0 %277
    %281 = vset.pattern.permute.xlu0 0
    %282 = vperm.xlu0 %281, %v236
    %v283 = vpop.permute.xlu0 %282
    %286 = vset.pattern.permute.xlu0 0
    %287 = vperm.xlu0 %286, %v237
    %v288 = vpop.permute.xlu0 %287
    %291 = vset.pattern.permute.xlu0 0
    %292 = vperm.xlu0 %291, %v238
    %v293 = vpop.permute.xlu0 %292
    %296 = vset.pattern.permute.xlu0 0
    %297 = vperm.xlu0 %296, %v239
    %v298 = vpop.permute.xlu0 %297
    %301 = vset.pattern.permute.xlu0 0
    %302 = vperm.xlu0 %301, %v240
    %v303 = vpop.permute.xlu0 %302
    %306 = vset.pattern.permute.xlu0 0
    %307 = vperm.xlu0 %306, %v241
    %v308 = vpop.permute.xlu0 %307
    %311 = vset.pattern.permute.xlu0 0
    %312 = vperm.xlu0 %311, %v242
    %v313 = vpop.permute.xlu0 %312
    %316 = vset.pattern.permute.xlu0 0
    %317 = vperm.xlu0 %316, %v243
    %v318 = vpop.permute.xlu0 %317
    %321 = vset.pattern.permute.xlu0 0
    %322 = vperm.xlu0 %321, %v244
    %v323 = vpop.permute.xlu0 %322
    %v325 = vmul.f32 %v248, %v151
    %v326 = vmul.f32 %v253, %v156
    %v327 = vmul.f32 %v258, %v161
    %v328 = vmul.f32 %v263, %v166
    %v329 = vmul.f32 %v268, %v171
    %v330 = vmul.f32 %v273, %v176
    %v331 = vmul.f32 %v278, %v181
    %v332 = vmul.f32 %v283, %v186
    %v333 = vmul.f32 %v288, %v191
    %v334 = vmul.f32 %v293, %v196
    %v335 = vmul.f32 %v298, %v201
    %v336 = vmul.f32 %v303, %v206
    %v337 = vmul.f32 %v308, %v211
    %v338 = vmul.f32 %v313, %v216
    %v339 = vmul.f32 %v318, %v221
    %v340 = vmul.f32 %v323, %v226
    %v341 = vpack.c.bf16 %v326, %v325
    %v342 = vpack.c.bf16 %v328, %v327
    %v343 = vpack.c.bf16 %v330, %v329
    %v344 = vpack.c.bf16 %v332, %v331
    %v345 = vpack.c.bf16 %v334, %v333
    %v346 = vpack.c.bf16 %v336, %v335
    %v347 = vpack.c.bf16 %v338, %v337
    %v348 = vpack.c.bf16 %v340, %v339
    %v357 = vunpack.c.l.b16 %v341
    %v358 = vunpack.c.h.b16 %v341
    %v359 = vunpack.c.l.b16 %v342
    %v360 = vunpack.c.h.b16 %v342
    %v361 = vunpack.c.l.b16 %v343
    %v362 = vunpack.c.h.b16 %v343
    %v363 = vunpack.c.l.b16 %v344
    %v364 = vunpack.c.h.b16 %v344
    %v365 = vunpack.c.l.b16 %v345
    %v366 = vunpack.c.h.b16 %v345
    %v367 = vunpack.c.l.b16 %v346
    %v368 = vunpack.c.h.b16 %v346
    %v369 = vunpack.c.l.b16 %v347
    %v370 = vunpack.c.h.b16 %v347
    %v371 = vunpack.c.l.b16 %v348
    %v372 = vunpack.c.h.b16 %v348
    %v373 = vpack.c.b16 %v357, %v357
    %v374 = vpack.c.b16 %v358, %v358
    %v375 = vpack.c.b16 %v359, %v359
    %v376 = vpack.c.b16 %v360, %v360
    %v377 = vpack.c.b16 %v361, %v361
    %v378 = vpack.c.b16 %v362, %v362
    %v379 = vpack.c.b16 %v363, %v363
    %v380 = vpack.c.b16 %v364, %v364
    %v381 = vpack.c.b16 %v365, %v365
    %v382 = vpack.c.b16 %v366, %v366
    %v383 = vpack.c.b16 %v367, %v367
    %v384 = vpack.c.b16 %v368, %v368
    %v385 = vpack.c.b16 %v369, %v369
    %v386 = vpack.c.b16 %v370, %v370
    %v387 = vpack.c.b16 %v371, %v371
    %v388 = vpack.c.b16 %v372, %v372
    %405 = vst [vmem:[#allocation2] sm:$0xf] %v373
    %406 = vst [vmem:[#allocation2 + $0x4] sm:$0xf] %v374
    %407 = vst [vmem:[#allocation2 + $0x8] sm:$0xf] %v375
    %408 = vst [vmem:[#allocation2 + $0xc] sm:$0xf] %v376
    %409 = vst [vmem:[#allocation2 + $0x10] sm:$0xf] %v377
    %410 = vst [vmem:[#allocation2 + $0x14] sm:$0xf] %v378
    %411 = vst [vmem:[#allocation2 + $0x18] sm:$0xf] %v379
    %412 = vst [vmem:[#allocation2 + $0x1c] sm:$0xf] %v380
    %413 = vst [vmem:[#allocation2 + $0x20] sm:$0xf] %v381
    %414 = vst [vmem:[#allocation2 + $0x24] sm:$0xf] %v382
    %415 = vst [vmem:[#allocation2 + $0x28] sm:$0xf] %v383
    %416 = vst [vmem:[#allocation2 + $0x2c] sm:$0xf] %v384
    %417 = vst [vmem:[#allocation2 + $0x30] sm:$0xf] %v385
    %418 = vst [vmem:[#allocation2 + $0x34] sm:$0xf] %v386
    %419 = vst [vmem:[#allocation2 + $0x38] sm:$0xf] %v387
    %420 = vst [vmem:[#allocation2 + $0x3c] sm:$0xf] %v388
    // Predicated region
    $region14: #{tpu_custom_call.1} parent=1 // pred_check
      _
    $region15: #{tpu_custom_call.1} parent=1 // pred_check_branch
      %422 = sbr.rel (0) target = $region17
    $region16: #{tpu_custom_call.1} parent=1 // pred_region
      %s424 = ssub.s32 1024, 1024
      %425 = vsyncadd [#allocation3], %s424
      %s426 = sshll.u32 [#allocation2], 4
      %s427 = int_to_ptr.vmem [resolvable:$true] %s426
      %432 = dma.vmem_to_hbm [thread:$0]  %s427, 1024, %s3, [#allocation3], 64, 64, 4
    $region17: #{tpu_custom_call.1} parent=1 // pred_fallthru
      _
    // Predicated region
    $region18: #{tpu_custom_call.1} parent=1 // pred_check
      _
    $region19: #{tpu_custom_call.1} parent=1 // pred_check_branch
      %434 = sbr.rel (0) target = $region21
    $region20: #{tpu_custom_call.1} parent=1 // pred_region
      %435 = dma.done [#allocation3], 1024
    $region21: #{tpu_custom_call.1} parent=1 // pred_fallthru
      _
    %436 = vsyncpa [#allocation3], 1

</llo_original>
